<compile_context>
chip_gen: v6e
topology: v6e:2x2x1
jax: 0.10.0
libtpu: 0.0.40
codegen_flags: <defaults>
</compile_context>

<pallas_src>
import functools
import math

import jax
import jax.numpy as jnp
from jax.experimental import pallas as pl
from jax.experimental.pallas import tpu as pltpu

# Conservative: fits v5e's 16 MiB scoped-VMEM default and v7x's 64 MiB physical.
_VMEM_BUDGET_BYTES = 12 * 1024 * 1024


def _param_loss_kernel(mask_ref, pred_ref, gt_ref, out_ref, acc_ref, *,
                       n_valid, tile, needs_mask):
    """One lane-tile step of the masked-MSE sum.

    mask_ref: [Bf, 1]    (VMEM)     per-row mask (broadcast over lanes)
    pred_ref: [Bf, tile] (VMEM)
    gt_ref:   [Bf, tile] (VMEM)
    out_ref:  [1, 1]     (SMEM)     final scalar, written on the last step only
    acc_ref:  [Bf, tile] (VMEM f32) running elementwise accumulator
    """
    i = pl.program_id(0)

    @pl.when(i == 0)
    def _init():
        acc_ref[...] = jnp.zeros_like(acc_ref)

    diff = pred_ref[...].astype(jnp.float32) - gt_ref[...].astype(jnp.float32)
    sq = diff * diff
    if needs_mask:
        # Tail block: lanes at global index >= n_valid are Pallas padding
        # (unspecified data); zero them before they touch the accumulator.
        lane = i * tile + jax.lax.broadcasted_iota(jnp.int32, sq.shape, 1)
        sq = jnp.where(lane < n_valid, sq, 0.0)

    acc_ref[...] += mask_ref[...] * sq  # [Bf,1] broadcast over lanes

    @pl.when(i == pl.num_programs(0) - 1)
    def _finalize():
        out_ref[0, 0] = jnp.sum(acc_ref[...])


def _parameter_loss_xla(pred_param, gt_param, has_param):
    """Plain-XLA path for tiny inputs (kernel launch overhead dominates)."""
    B = pred_param.shape[0]
    m = has_param.astype(jnp.float32).reshape((B,) + (1,) * (pred_param.ndim - 1))
    d = pred_param.astype(jnp.float32) - gt_param.astype(jnp.float32)
    return jnp.sum(m * d * d)


@functools.partial(jax.jit, static_argnames=("lane_tile", "min_pallas_elements"))
def parameter_loss(pred_param, gt_param, has_param, *, lane_tile=4096,
                   min_pallas_elements=2048):
    """JAX/Pallas equivalent of ParameterLoss.forward."""
    assert pred_param.shape == gt_param.shape
    out_dtype = pred_param.dtype
    B = pred_param.shape[0]
    total = 1
    for s in pred_param.shape:
        total *= s
    if total == 0:
        return jnp.zeros((), dtype=out_dtype)
    N = total // B

    if total < min_pallas_elements:
        return _parameter_loss_xla(pred_param, gt_param, has_param).astype(out_dtype)

    pred2 = pred_param.reshape(B, N)
    gt2 = gt_param.reshape(B, N)
    mask = has_param.astype(jnp.float32).reshape(B)

    # Fold rows so the sublane dim is a multiple of 8 (full vreg utilization).
    # This is a free, view-level reshape of contiguous row-major data.
    r = 1
    if B % 8 != 0:
        cand = 8 // math.gcd(B, 8)
        if N % cand == 0:
            r = cand
    Bf, Nf = B * r, N // r
    pred2 = pred2.reshape(Bf, Nf)
    gt2 = gt2.reshape(Bf, Nf)
    mask2 = jnp.repeat(mask, r).reshape(Bf, 1)

    # Lane tile: large (amortize ~0.35 us/step pipeline overhead), multiple of
    # 128, capped so 2 inputs x 2 pipeline buffers + the f32 accumulator fit a
    # conservative VMEM budget on every generation (v5e/v6e/v7x).
    itemsize = pred2.dtype.itemsize
    bytes_per_lane = Bf * (2 * 2 * itemsize + 4)
    max_tile = max(128, (_VMEM_BUDGET_BYTES // bytes_per_lane) // 128 * 128)
    lane_tile = max(128, (lane_tile // 128) * 128)
    lane_tile = min(lane_tile, max_tile)

    if Nf <= lane_tile:
        tile = Nf                # one full-extent block: always a legal shape
        needs_mask = False
    else:
        tile = lane_tile         # multiple of 128
        needs_mask = (Nf % tile) != 0
    grid = pl.cdiv(Nf, tile)

    kernel = functools.partial(_param_loss_kernel, n_valid=Nf, tile=tile,
                               needs_mask=needs_mask)

    cost = pl.CostEstimate(
        flops=4 * total,                       # sub, square, mask-mul, acc-add
        transcendentals=0,
        bytes_accessed=2 * total * itemsize + Bf * 4 + 4,
    )

    out = pl.pallas_call(
        kernel,
        out_shape=jax.ShapeDtypeStruct((1, 1), jnp.float32),
        grid_spec=pltpu.PrefetchScalarGridSpec(
            num_scalar_prefetch=0,
            grid=(grid,),
            in_specs=[
                pl.BlockSpec((Bf, 1), lambda i: (0, 0)),      # mask (resident)
                pl.BlockSpec((Bf, tile), lambda i: (0, i)),   # pred lane tile
                pl.BlockSpec((Bf, tile), lambda i: (0, i)),   # gt lane tile
            ],
            out_specs=pl.BlockSpec((1, 1), lambda i: (0, 0),
                                   memory_space=pltpu.SMEM),
            scratch_shapes=[pltpu.VMEM((Bf, tile), jnp.float32)],
        ),
        compiler_params=pltpu.CompilerParams(
            dimension_semantics=("arbitrary",),   # grid axis is a reduction
        ),
        cost_estimate=cost,
    )(mask2, pred2, gt2)

    # TODO(synk): on v7x a leading "parallel" axis could split the lane range
    # across the 2 TensorCores for ~2x; kept single-core here for portability
    # (SMPL parameter tensors are small, so the kernel is launch/HBM bound).
    return out[0, 0].astype(out_dtype)


if __name__ == "__main__":
    key = jax.random.PRNGKey(0)
    k1, k2, k3, k4, k5, k6 = jax.random.split(key, 6)

    # Case 1: tiny SMPL-like shapes [B, S, D] from the module docstring.
    B, S, D = 2, 8, 24
    pred1 = jax.random.normal(k1, (B, S, D), dtype=jnp.float32)
    gt1 = jax.random.normal(k2, (B, S, D), dtype=jnp.float32)
    has1 = (jax.random.uniform(k3, (B,)) > 0.3).astype(jnp.float32)
    # Force the Pallas path even at this tiny size so the kernel is exercised.
    loss1 = jax.block_until_ready(
        parameter_loss(pred1, gt1, has1, min_pallas_elements=0))
    ref1 = jnp.sum(has1.reshape(B, 1, 1) * (pred1 - gt1) ** 2)
    assert jnp.allclose(loss1, ref1, rtol=1e-5, atol=1e-5), (loss1, ref1)

    # Case 2: larger parameter block; small lane_tile to exercise the
    # multi-tile reduction grid and the in-kernel tail mask.
    B2, S2, D2 = 2, 32, 144
    pred2 = jax.random.normal(k4, (B2, S2, D2), dtype=jnp.float32)
    gt2 = jax.random.normal(k5, (B2, S2, D2), dtype=jnp.float32)
    has2 = (jax.random.uniform(k6, (B2,)) > 0.3).astype(jnp.float32)
    loss2 = jax.block_until_ready(
        parameter_loss(pred2, gt2, has2, lane_tile=256, min_pallas_elements=0))
    ref2 = jnp.sum(has2.reshape(B2, 1, 1) * (pred2 - gt2) ** 2)
    assert jnp.allclose(loss2, ref2, rtol=1e-5, atol=1e-4), (loss2, ref2)

    print("KERNEL_OK")
</pallas_src>

<mosaic_0001>
module attributes {stable_mosaic.version = 11 : i64} {
  func.func @_param_loss_kernel(%arg0: i32, %arg1: memref<8x1xf32, #tpu.memory_space<vmem>>, %arg2: memref<8x48xf32, #tpu.memory_space<vmem>>, %arg3: memref<8x48xf32, #tpu.memory_space<vmem>>, %arg4: memref<1x1xf32, #tpu.memory_space<smem>>, %arg5: memref<8x48xf32, #tpu.memory_space<vmem>>) attributes {dimension_semantics = [#tpu.dimension_semantics<arbitrary>], iteration_bounds = array<i64: 1>, scalar_prefetch = 0 : i64, scratch_operands = 1 : i64, tpu.core_type = #tpu.core_type<tc>, window_params = [{pipeline_mode = #tpu.pipeline_mode<synchronous>, transform_indices = @transform_0, window_bounds = array<i64: 8, 1>}, {transform_indices = @transform_1, window_bounds = array<i64: 8, 48>}, {transform_indices = @transform_2, window_bounds = array<i64: 8, 48>}, {transform_indices = @transform_3, window_bounds = array<i64: 1, 1>}]} {
    %c0_i32 = arith.constant 0 : i32
    %0 = arith.cmpi eq, %arg0, %c0_i32 : i32
    %1 = arith.extui %0 : i1 to i32
    %c0_i32_0 = arith.constant 0 : i32
    %2 = arith.cmpi ne, %1, %c0_i32_0 : i32
    scf.if %2 {
      %cst = arith.constant 0.000000e+00 : f32
      %16 = vector.broadcast %cst : f32 to vector<8x48xf32>
      %c0_12 = arith.constant 0 : index
      %c0_13 = arith.constant 0 : index
      %17 = vector.load %arg5[%c0_12, %c0_13] : memref<8x48xf32, #tpu.memory_space<vmem>>, vector<8x48xf32>
      tpu.vector_store %arg5[%c0_12, %c0_13], %16 {strides = array<i32>} : memref<8x48xf32, #tpu.memory_space<vmem>>, vector<8x48xf32>,
    } else {
    }
    %c0 = arith.constant 0 : index
    %c0_1 = arith.constant 0 : index
    %3 = vector.load %arg2[%c0, %c0_1] : memref<8x48xf32, #tpu.memory_space<vmem>>, vector<8x48xf32>
    %c0_2 = arith.constant 0 : index
    %c0_3 = arith.constant 0 : index
    %4 = vector.load %arg3[%c0_2, %c0_3] : memref<8x48xf32, #tpu.memory_space<vmem>>, vector<8x48xf32>
    %5 = arith.subf %3, %4 : vector<8x48xf32>
    %6 = arith.mulf %5, %5 : vector<8x48xf32>
    %c0_4 = arith.constant 0 : index
    %c0_5 = arith.constant 0 : index
    %7 = vector.load %arg5[%c0_4, %c0_5] : memref<8x48xf32, #tpu.memory_space<vmem>>, vector<8x48xf32>
    %c0_6 = arith.constant 0 : index
    %c0_7 = arith.constant 0 : index
    %8 = vector.load %arg1[%c0_6, %c0_7] : memref<8x1xf32, #tpu.memory_space<vmem>>, vector<8x1xf32>
    %9 = vector.broadcast %8 : vector<8x1xf32> to vector<8x48xf32>
    %10 = arith.mulf %9, %6 : vector<8x48xf32>
    %11 = arith.addf %7, %10 : vector<8x48xf32>
    %c0_8 = arith.constant 0 : index
    %c0_9 = arith.constant 0 : index
    %12 = vector.load %arg5[%c0_8, %c0_9] : memref<8x48xf32, #tpu.memory_space<vmem>>, vector<8x48xf32>
    tpu.vector_store %arg5[%c0_8, %c0_9], %11 {strides = array<i32>} : memref<8x48xf32, #tpu.memory_space<vmem>>, vector<8x48xf32>,
    %c0_i32_10 = arith.constant 0 : i32
    %13 = arith.cmpi eq, %arg0, %c0_i32_10 : i32
    %14 = arith.extui %13 : i1 to i32
    %c0_i32_11 = arith.constant 0 : i32
    %15 = arith.cmpi ne, %14, %c0_i32_11 : i32
    scf.if %15 {
      %c0_12 = arith.constant 0 : index
      %c0_13 = arith.constant 0 : index
      %16 = vector.load %arg5[%c0_12, %c0_13] : memref<8x48xf32, #tpu.memory_space<vmem>>, vector<8x48xf32>
      %17 = vector.shape_cast %16 : vector<8x48xf32> to vector<1x8x48xf32>
      %cst = arith.constant dense<0.000000e+00> : vector<1xf32>
      %18 = vector.multi_reduction <add>, %17, %cst [1, 2] : vector<1x8x48xf32> to vector<1xf32>
      %19 = vector.shape_cast %18 : vector<1xf32> to vector<1x1x1xf32>
      %20 = vector.extract %19[0, 0, 0] : f32 from vector<1x1x1xf32>
      %c0_14 = arith.constant 0 : index
      %c0_15 = arith.constant 0 : index
      %21 = memref.load %arg4[%c0_14, %c0_15] : memref<1x1xf32, #tpu.memory_space<smem>>
      memref.store %20, %arg4[%c0_14, %c0_15] : memref<1x1xf32, #tpu.memory_space<smem>>
    } else {
    }
    return
  }
  func.func @transform_0(%arg0: i32) -> (i32, i32) {
    %c0_i32 = arith.constant 0 : i32
    %c0_i32_0 = arith.constant 0 : i32
    %c0_i32_1 = arith.constant 0 : i32
    return %c0_i32, %c0_i32_0 : i32, i32
  }
  func.func @transform_1(%arg0: i32) -> (i32, i32) {
    %c0_i32 = arith.constant 0 : i32
    %c0_i32_0 = arith.constant 0 : i32
    return %c0_i32, %arg0 : i32, i32
  }
  func.func @transform_2(%arg0: i32) -> (i32, i32) {
    %c0_i32 = arith.constant 0 : i32
    %c0_i32_0 = arith.constant 0 : i32
    return %c0_i32, %arg0 : i32, i32
  }
  func.func @transform_3(%arg0: i32) -> (i32, i32) {
    %c0_i32 = arith.constant 0 : i32
    %c0_i32_0 = arith.constant 0 : i32
    %c0_i32_1 = arith.constant 0 : i32
    return %c0_i32, %c0_i32_0 : i32, i32
  }
}

</mosaic_0001>

<llo_original>
// kernel: parameter_loss.1
$region0: #{parameter_loss.1}
  #allocation0 [shape = 'u32[]', space=smem, size = 0x4, offset = 0x4, fixed_abs, tag = 'smem constant byte address 0x4 - core index']
  #allocation1 [shape = 'u32[144,128]{1,0:T(1,128)}', space=vmem, size = 0x12000, scoped, tag = 'internal scratch']
  #allocation2 [shape = 'f32[8,48]{1,0:T(8,128)}', space=vmem, size = 0x1000, scoped, tag = 'scratch operand']
  %s0 = inlined_call_operand.vmem [shape: f32[8,1], index: 0, kind: input, shape index: {}]
  %s1 = inlined_call_operand.vmem [shape: f32[8,48], index: 1, kind: input, shape index: {}]
  %s2 = inlined_call_operand.vmem [shape: f32[8,48], index: 2, kind: input, shape index: {}]
  %s3 = inlined_call_operand.hbm [shape: f32[1,1], index: 3, kind: output, shape index: {}]
  %s4 = sld [smem:[#allocation0]]
  $region30: #{parameter_loss.1} parent=0
    _
  %s6 = ssub.s32 1, %s4
  %s7 = scalar_select 0, %s6, %s4
  $region1: #{parameter_loss.1} parent=0
    #allocation3 [shape = 'u8[512]{0}', space=smem, size = 0x200, scoped, tag = 'output window, operand 0, single buffered']
    #allocation4 [shape = 's32[1]{0}', space=sflag, size = 0x4, scoped, tag = 'scoped memory for parameter_loss.1']
    %8 = vsyncpa [#allocation4], 0
    // Predicated region
    $region2: #{parameter_loss.1} parent=1 // pred_check
      _
    $region3: #{parameter_loss.1} parent=1 // pred_check_branch
      %10 = sbr.rel (0) target = $region5
    $region4: #{parameter_loss.1} parent=1 // pred_region
      _
    $region5: #{parameter_loss.1} parent=1 // pred_fallthru
      _
    // Predicated region
    $region6: #{parameter_loss.1} parent=1 // pred_check
      _
    $region7: #{parameter_loss.1} parent=1 // pred_check_branch
      %12 = sbr.rel (0) target = $region9
    $region8: #{parameter_loss.1} parent=1 // pred_region
      _
    $region9: #{parameter_loss.1} parent=1 // pred_fallthru
      _
    // Predicated region
    $region10: #{parameter_loss.1} parent=1 // pred_check
      _
    $region11: #{parameter_loss.1} parent=1 // pred_check_branch
      %14 = sbr.rel (0) target = $region13
    $region12: #{parameter_loss.1} parent=1 // pred_region
      _
    $region13: #{parameter_loss.1} parent=1 // pred_fallthru
      _
    %p15 = scmp.eq.s32.totalorder 0, 0
    // Predicated region
    $region14: #{parameter_loss.1} parent=1 // pred_check
      %p16 = pneg %p15
    $region15: #{parameter_loss.1} parent=1 // pred_check_branch
      %18 = sbr.rel (%p16) target = $region17
    $region16: #{parameter_loss.1} parent=1 // pred_region
      %vm19 = vcmask 392192
      %20 = vst.msk [vmem:[#allocation2] sm:$0xff] %vm19, 0.0
    $region17: #{parameter_loss.1} parent=1 // pred_fallthru
      _
    %v21 = vld [vmem:[%s1] sm:$0xff]
    %v22 = vld [vmem:[%s2] sm:$0xff]
    %v23 = vsub.f32 %v21, %v22
    %v24 = vmul.f32 %v23, %v23
    %v25 = vld [vmem:[#allocation2] sm:$0xff]
    %v26 = vld [vmem:[%s0] sm:$0xff]
    %28 = vset.pattern.permute.xlu0 0
    %29 = vperm.xlu0 %28, %v26
    %v30 = vpop.permute.xlu0 %29
    %v32 = vmul.f32 %v30, %v24
    %v33 = vadd.f32 %v25, %v32
    %vm34 = vcmask 392192
    %35 = vst.msk [vmem:[#allocation2] sm:$0xff] %vm34, %v33
    // Predicated region
    $region18: #{parameter_loss.1} parent=1 // pred_check
      %p36 = pneg %p15
    $region19: #{parameter_loss.1} parent=1 // pred_check_branch
      %38 = sbr.rel (%p36) target = $region21
    $region20: #{parameter_loss.1} parent=1 // pred_region
      %v39 = vld [vmem:[#allocation2] sm:$0xff]
      %v40 = vsel %vm34, %v39, 0.0
      %41 = vadd.xlane.f32.xlu0 %v40
      %v42 = vpop.xlane.xlu0 %41
      %v43 = vrot.slane %v42, 4
      %v44 = vadd.f32 %v42, %v43
      %v45 = vrot.slane %v44, 2
      %v46 = vadd.f32 %v44, %v45
      %v47 = vrot.slane %v46, 1
      %v48 = vadd.f32 %v46, %v47
      %s49 = vtos %v48
      %s50 = scalar_lea.smem [#allocation3], 0
      %51 = sst [smem:[%s50]] %s49
    $region21: #{parameter_loss.1} parent=1 // pred_fallthru
      _
    // Predicated region
    $region22: #{parameter_loss.1} parent=1 // pred_check
      _
    $region23: #{parameter_loss.1} parent=1 // pred_check_branch
      %53 = sbr.rel (0) target = $region25
    $region24: #{parameter_loss.1} parent=1 // pred_region
      %s55 = ssub.s32 16, 16
      %56 = vsyncadd [#allocation4], %s55
      %59 = dma.smem_to_hbm [#allocation3], 16, %s3, [#allocation4]
    $region25: #{parameter_loss.1} parent=1 // pred_fallthru
      _
    // Predicated region
    $region26: #{parameter_loss.1} parent=1 // pred_check
      _
    $region27: #{parameter_loss.1} parent=1 // pred_check_branch
      %61 = sbr.rel (0) target = $region29
    $region28: #{parameter_loss.1} parent=1 // pred_region
      %62 = dma.done [#allocation4], 16
    $region29: #{parameter_loss.1} parent=1 // pred_fallthru
      _
    %63 = sfence
    %64 = vsyncpa [#allocation4], 1

</llo_original>
